<compile_context>
chip_gen: v7x
topology: tpu7x:2x2x1
jax: 0.10.0
libtpu: 0.0.40
codegen_flags: <defaults>
</compile_context>

<pallas_src>
import functools

import jax
import jax.numpy as jnp
from jax.experimental import pallas as pl
from jax.experimental.pallas import tpu as pltpu


def _round_up(v, m):
    return (v + m - 1) // m * m


def _patch_embed_kernel(x_ref, w_ref, pos_ref, out_ref):
    # x_ref:   (GB, Rp, Kp) bf16 — patches; rows 0..2 (token slots) and the
    #          Rp-R tail rows of every batch element are zeros.
    # w_ref:   (Kp, Ep)     bf16 — flattened conv weight (transposed, padded).
    # pos_ref: (Rp, Ep)     f32  — positions with tokens / conv bias folded in.
    # out_ref: (GB, Rp, Ep)
    GB, Rp, Kp = x_ref.shape
    Ep = w_ref.shape[1]
    # Rp % 16 == 0 and Kp/Ep % 128 == 0 -> these reshapes are layout-free for
    # both bf16 (16,128) and f32 (8,128) tiles: one MXU matmul for the whole
    # (GB*Rp)-row block, RHS stays stationary.
    x2 = x_ref[...].reshape(GB * Rp, Kp)
    proj = jnp.dot(x2, w_ref[...], preferred_element_type=jnp.float32)
    out = proj.reshape(GB, Rp, Ep) + pos_ref[...][None]   # f32 add on the VPU
    out_ref[...] = out.astype(out_ref.dtype)


def patch_embedding(x, conv_w, conv_b, src_tok, tgt_tok, dom_tok, positions,
                    *, patch_size, batch_group=8, out_dtype=jnp.float32,
                    lane_multiple=128):
    """x: (B, C, H, W) f32 NCHW. Returns (B, (H//p)*(W//p) + 3, E)."""
    B, C, H, W = x.shape
    p = patch_size
    Hp, Wp = H // p, W // p
    N = Hp * Wp
    R = N + 3                                  # src + tgt + domain tokens
    E = conv_w.shape[0]
    K = C * p * p

    # Lane alignment: 128 is mandatory (lane width).  Real DeiT dims
    # (K = E = 768) are already multiples of 256, so the full-width MXU on
    # v6e/v7x is used without over-padding small shapes (important on v5e,
    # where K=48 -> 128 already pads the contraction with zeros).
    Kp = _round_up(K, lane_multiple)
    Ep = _round_up(E, lane_multiple)
    # Rows padded to a multiple of 16 so the bf16 (16,128) packed tiles of the
    # patches block merge/split layout-free in the in-kernel reshape.
    Rp = _round_up(R, 16)

    # Batch grouping: bigger M-tiles amortize the ~0.35us/step grid overhead
    # and give bigger DMA tiles, but keep >= 2 grid steps so the "parallel"
    # axis can shard across both v7x TensorCores.
    GB = max(1, min(batch_group, B))
    if B >= 2:
        GB = max(1, min(GB, B // 2))
    Bp = _round_up(B, GB)
    grid = Bp // GB

    out_bytes = jnp.dtype(out_dtype).itemsize
    # VMEM budget: patches/out tiles are double-buffered; weight/pos are
    # single-buffered (pl.Buffered(1), constant index_map).  2x headroom,
    # capped below v7x's 64 MiB physical VMEM.
    patches_tile = GB * Rp * Kp * 2
    out_tile = GB * Rp * Ep * out_bytes
    const_bytes = Kp * Ep * 2 + Rp * Ep * 4
    vmem_est = 2 * (patches_tile + out_tile) + const_bytes
    vmem_limit = int(min(48 * 2**20, max(32 * 2**20, 2 * vmem_est)))

    cost = pl.CostEstimate(
        flops=2 * Bp * Rp * Kp * Ep,
        transcendentals=0,
        bytes_accessed=(Bp * Rp * Kp * 2 + Kp * Ep * 2 + Rp * Ep * 4
                        + Bp * Rp * Ep * out_bytes),
    )

    # --- im2col glue --------------------------------------------------------
    # (B,C,H,W) -> (B, N, C*p*p) with feature order (c, kh, kw) so a plain
    # matmul against conv_w.reshape(E, K) reproduces the stride==kernel conv.
    # allow_input_fusion below lets XLA fold this producer into the call.
    patches = x.reshape(B, C, Hp, p, Wp, p).transpose(0, 2, 4, 1, 3, 5)
    patches = patches.reshape(B, N, K)
    # Prepend 3 zero token rows, pad rows R -> Rp, K -> Kp, B -> Bp.
    patches = jnp.pad(patches, ((0, Bp - B), (3, Rp - R), (0, Kp - K)))
    patches = patches.astype(jnp.bfloat16)     # MXU-native input dtype

    # --- constants, pre-folded in f32 ---------------------------------------
    w_kt = conv_w.reshape(E, K).T                                   # (K, E)
    w_kt = jnp.pad(w_kt, ((0, Kp - K), (0, Ep - E))).astype(jnp.bfloat16)

    tokens = jnp.concatenate([src_tok.reshape(1, E),
                              tgt_tok.reshape(1, E),
                              dom_tok.reshape(1, E)], axis=0)       # (3, E)
    pos_full = jnp.concatenate(
        [positions[:3] + tokens,                # token rows (zero matmul rows)
         positions[3:] + conv_b[None, :]],      # conv bias folded into pos
        axis=0)                                                     # (R, E) f32
    pos_full = jnp.pad(pos_full, ((0, Rp - R), (0, Ep - E)))

    out = pl.pallas_call(
        _patch_embed_kernel,
        out_shape=jax.ShapeDtypeStruct((Bp, Rp, Ep), out_dtype),
        grid=(grid,),
        in_specs=[
            pl.BlockSpec((GB, Rp, Kp), lambda g: (g, 0, 0)),
            # Grid-invariant operands: constant index_map => fetched once,
            # single-buffered to save VMEM.
            pl.BlockSpec((Kp, Ep), lambda g: (0, 0),
                         pipeline_mode=pl.Buffered(1)),
            pl.BlockSpec((Rp, Ep), lambda g: (0, 0),
                         pipeline_mode=pl.Buffered(1)),
        ],
        out_specs=pl.BlockSpec((GB, Rp, Ep), lambda g: (g, 0, 0)),
        compiler_params=pltpu.CompilerParams(
            dimension_semantics=("parallel",),
            vmem_limit_bytes=vmem_limit,
            allow_input_fusion=[True, False, False]),
        cost_estimate=cost,
    )(patches, w_kt, pos_full)

    return out[:B, :R, :E]


def _reference(x, conv_w, conv_b, src_tok, tgt_tok, dom_tok, positions, p):
    B, C, H, W = x.shape
    Hp, Wp = H // p, W // p
    E = conv_w.shape[0]
    patches = x.reshape(B, C, Hp, p, Wp, p).transpose(0, 2, 4, 1, 3, 5)
    patches = patches.reshape(B, Hp * Wp, C * p * p)
    proj = jnp.einsum("bnk,ek->bne", patches, conv_w.reshape(E, -1)) + conv_b
    toks = jnp.concatenate([
        jnp.broadcast_to(src_tok.reshape(1, 1, E), (B, 1, E)),
        jnp.broadcast_to(tgt_tok.reshape(1, 1, E), (B, 1, E)),
        jnp.broadcast_to(dom_tok.reshape(1, 1, E), (B, 1, E)),
    ], axis=1)
    return jnp.concatenate([toks, proj], axis=1) + positions


if __name__ == "__main__":
    # Small shapes: B=4, C=3, 16x16 image, patch 4 -> N=16 patches, E=128
    # (E a lane-width multiple so output stores are unmasked).
    B, C, IMG, P, E = 4, 3, 16, 4, 128
    N = (IMG // P) ** 2          # 16 patches -> sequence length N + 3 = 19

    key = jax.random.PRNGKey(0)
    kx, kw, kb, ks, kt, kd, kp = jax.random.split(key, 7)

    x = jax.random.normal(kx, (B, C, IMG, IMG), dtype=jnp.float32)
    conv_w = jax.random.normal(kw, (E, C, P, P), dtype=jnp.float32) * 0.02
    conv_b = jax.random.normal(kb, (E,), dtype=jnp.float32) * 0.02
    src_tok = jax.random.normal(ks, (1, 1, E), dtype=jnp.float32)
    tgt_tok = jax.random.normal(kt, (1, 1, E), dtype=jnp.float32)
    dom_tok = jax.random.normal(kd, (1, 1, E), dtype=jnp.float32)
    positions = jax.random.normal(kp, (N + 3, E), dtype=jnp.float32)

    fwd = jax.jit(functools.partial(patch_embedding, patch_size=P))
    out = jax.block_until_ready(
        fwd(x, conv_w, conv_b, src_tok, tgt_tok, dom_tok, positions))

    ref = _reference(x, conv_w, conv_b, src_tok, tgt_tok, dom_tok, positions, P)
    assert out.shape == (B, N + 3, E), out.shape
    # bf16 matmul inputs (f32 accumulate) -> loosened tolerance vs f32 ref.
    max_err = float(jnp.max(jnp.abs(out - ref)))
    assert jnp.allclose(out, ref, atol=2e-2, rtol=2e-2), max_err

    print("KERNEL_OK")
</pallas_src>

<mosaic_0001>
module attributes {stable_mosaic.version = 11 : i64} {
  func.func @_patch_embed_kernel(%arg0: i32, %arg1: memref<2x32x128xbf16, #tpu.memory_space<vmem>>, %arg2: memref<128x128xbf16, #tpu.memory_space<vmem>>, %arg3: memref<32x128xf32, #tpu.memory_space<vmem>>, %arg4: memref<2x32x128xf32, #tpu.memory_space<vmem>>) attributes {dimension_semantics = [#tpu.dimension_semantics<parallel>], iteration_bounds = array<i64: 2>, scalar_prefetch = 0 : i64, scratch_operands = 0 : i64, tpu.core_type = #tpu.core_type<tc>, window_params = [{transform_indices = @transform_0, window_bounds = array<i64: 2, 32, 128>}, {pipeline_mode = #tpu.pipeline_mode<synchronous>, transform_indices = @transform_1, window_bounds = array<i64: 128, 128>}, {pipeline_mode = #tpu.pipeline_mode<synchronous>, transform_indices = @transform_2, window_bounds = array<i64: 32, 128>}, {transform_indices = @transform_3, window_bounds = array<i64: 2, 32, 128>}]} {
    %c0 = arith.constant 0 : index
    %c0_0 = arith.constant 0 : index
    %c0_1 = arith.constant 0 : index
    %0 = vector.load %arg1[%c0, %c0_0, %c0_1] : memref<2x32x128xbf16, #tpu.memory_space<vmem>>, vector<2x32x128xbf16>
    %1 = vector.shape_cast %0 : vector<2x32x128xbf16> to vector<64x128xbf16>
    %c0_2 = arith.constant 0 : index
    %c0_3 = arith.constant 0 : index
    %2 = vector.load %arg2[%c0_2, %c0_3] : memref<128x128xbf16, #tpu.memory_space<vmem>>, vector<128x128xbf16>
    %cst = arith.constant dense<0.000000e+00> : vector<64x128xf32>
    %3 = tpu.matmul %1, %2, %cst {dimension_numbers = #tpu.dot_dimension_numbers<[1], [0], [0], [1], [0, 0, 1, 1], [], []>} : vector<64x128xbf16>, vector<128x128xbf16>, vector<64x128xf32> -> vector<64x128xf32>
    %4 = vector.shape_cast %3 : vector<64x128xf32> to vector<2x32x128xf32>
    %c0_4 = arith.constant 0 : index
    %c0_5 = arith.constant 0 : index
    %5 = vector.load %arg3[%c0_4, %c0_5] : memref<32x128xf32, #tpu.memory_space<vmem>>, vector<32x128xf32>
    %6 = vector.shape_cast %5 : vector<32x128xf32> to vector<1x32x128xf32>
    %7 = vector.broadcast %6 : vector<1x32x128xf32> to vector<2x32x128xf32>
    %8 = arith.addf %4, %7 : vector<2x32x128xf32>
    %c0_6 = arith.constant 0 : index
    %c0_7 = arith.constant 0 : index
    %c0_8 = arith.constant 0 : index
    %9 = vector.load %arg4[%c0_6, %c0_7, %c0_8] : memref<2x32x128xf32, #tpu.memory_space<vmem>>, vector<2x32x128xf32>
    tpu.vector_store %arg4[%c0_6, %c0_7, %c0_8], %8 {strides = array<i32>} : memref<2x32x128xf32, #tpu.memory_space<vmem>>, vector<2x32x128xf32>,
    return
  }
  func.func @transform_0(%arg0: i32) -> (i32, i32, i32) {
    %c0_i32 = arith.constant 0 : i32
    %c0_i32_0 = arith.constant 0 : i32
    %c0_i32_1 = arith.constant 0 : i32
    return %arg0, %c0_i32, %c0_i32_0 : i32, i32, i32
  }
  func.func @transform_1(%arg0: i32) -> (i32, i32) {
    %c0_i32 = arith.constant 0 : i32
    %c0_i32_0 = arith.constant 0 : i32
    %c0_i32_1 = arith.constant 0 : i32
    return %c0_i32, %c0_i32_0 : i32, i32
  }
  func.func @transform_2(%arg0: i32) -> (i32, i32) {
    %c0_i32 = arith.constant 0 : i32
    %c0_i32_0 = arith.constant 0 : i32
    %c0_i32_1 = arith.constant 0 : i32
    return %c0_i32, %c0_i32_0 : i32, i32
  }
  func.func @transform_3(%arg0: i32) -> (i32, i32, i32) {
    %c0_i32 = arith.constant 0 : i32
    %c0_i32_0 = arith.constant 0 : i32
    %c0_i32_1 = arith.constant 0 : i32
    return %arg0, %c0_i32, %c0_i32_0 : i32, i32, i32
  }
}

</mosaic_0001>

<llo_original>
// kernel: patch_embedding.2
$region0: #{patch_embedding.2}
  #allocation0 [shape = 'u32[]', space=smem, size = 0x4, offset = 0x4, fixed_abs, tag = 'smem constant byte address 0x4 - core index']
  #allocation1 [shape = 'u32[144,128]{1,0:T(1,128)}', space=vmem, size = 0x12000, scoped, tag = 'internal scratch']
  #allocation2 [shape = 'u32[2048]{0}', space=vmem, size = 0x2000, scoped, tag = 'scoped memory for patch_embedding.2']
  #allocation3 [shape = 'u32[2048]{0}', space=vmem, size = 0x2000, scoped, tag = 'scoped memory for patch_embedding.2']
  #allocation4 [shape = 'u32[2048]{0}', space=vmem, size = 0x2000, scoped, tag = 'scoped memory for patch_embedding.2']
  #allocation5 [shape = 'u32[2048]{0}', space=vmem, size = 0x2000, scoped, tag = 'scoped memory for patch_embedding.2']
  #allocation6 [shape = 'u32[2048]{0}', space=vmem, size = 0x2000, scoped, tag = 'scoped memory for patch_embedding.2']
  %s0 = inlined_call_operand.vmem [shape: bf16[128,128], index: 0, kind: input, shape index: {}]
  %s1 = inlined_call_operand.vmem [shape: f32[32,128], index: 1, kind: input, shape index: {}]
  %s2 = inlined_call_operand.vmem [shape: bf16[4,16,48], index: 2, kind: input, shape index: {}]
  %s3 = inlined_call_operand.<no memory space> [shape: bf16[], index: 3, kind: input, shape index: {}]
  %s4 = inlined_call_operand.vmem [shape: f32[4,32,128], index: 4, kind: output, shape index: {}]
  %s5 = sld [smem:[#allocation0]]
  $region45: #{patch_embedding.2} parent=0
    _
  %s7 = ssub.s32 1, %s5
  %s8 = scalar_select 0, %s7, %s5
  %v9 = vstv %s3
  %v10 = vunpack.i.l.bf16 %v9
  %v12 = vunpack.i.h.bf16 %v9
  loop: start=0, step=1, limit=4
  $region2: #{patch_embedding.2} parent=0 // loop_pre_header
    _
  $region3: #{patch_embedding.2} parent=0 // loop_header
    %s15 = sphi 0, %s19
    %p16 = scmp.ge.s32.totalorder %s15, 4
    %s25 = sphi 0, %s27
    %s28 = sphi 0, %s25
    %s29 = sphi 0, %s28
    %s45 = sphi 0, %s29
    %s49 = sphi 0, %s49
    %s51 = sphi 0, %s49
    %s52 = sphi 0, %s51
    %s66 = sphi 0, %s52
    %s70 = sphi 0, %s70
    %s72 = sphi 0, %s70
    %s73 = sphi 0, %s72
    %s87 = sphi 0, %s73
    %s93 = sphi 0, %s95
    %s96 = sphi 0, %s93
    %s97 = sphi 0, %s96
    %s113 = sphi 0, %s97
  $region4: #{patch_embedding.2} parent=0 // loop_header_branch
    %18 = sbr.rel (%p16) target = $region8
  $region5: #{patch_embedding.2} parent=0 // loop_body
    %s20 = ssub.s32 %s15, 1
    %s21 = ssub.s32 %s15, 2
    %s22 = sadd.s32 %s15, 1
    %s23 = ssub.s32 %s15, %s22
    %p24 = scmp.eq.s32.totalorder %s23, 0
    %s26 = sadd.s32 %s25, 1
    %s27 = scalar_select %p24, %s25, %s26
    %p30 = pneg %p24
    %p31 = scmp.eq.s32.totalorder %s15, 1
    %p32 = por %p30, %p31
    %p33 = scmp.ne.s32.totalorder %s25, %s28
    %p34 = scmp.eq.s32.totalorder %s15, 0
    %p35 = por %p33, %p34
    %p36 = scmp.ne.s32.totalorder %s25, %s28
    %p37 = scmp.eq.s32.totalorder %s20, 1
    %p38 = por %p36, %p37
    %p39 = scmp.ne.s32.totalorder %s28, %s29
    %p40 = scmp.eq.s32.totalorder %s20, 0
    %p41 = por %p39, %p40
    %p42 = scmp.ne.s32.totalorder %s28, %s29
    %p43 = scmp.eq.s32.totalorder %s21, 1
    %p44 = por %p42, %p43
    %p46 = scmp.ne.s32.totalorder %s29, %s45
    %p47 = scmp.eq.s32.totalorder %s21, 0
    %p48 = por %p46, %p47
    %s50 = sadd.s32 %s49, 1
    %p53 = scmp.eq.s32.totalorder %s15, 1
    %p54 = scmp.ne.s32.totalorder %s49, %s51
    %p55 = scmp.eq.s32.totalorder %s15, 0
    %p56 = por %p54, %p55
    %p57 = scmp.ne.s32.totalorder %s49, %s51
    %p58 = scmp.eq.s32.totalorder %s20, 1
    %p59 = por %p57, %p58
    %p60 = scmp.ne.s32.totalorder %s51, %s52
    %p61 = scmp.eq.s32.totalorder %s20, 0
    %p62 = por %p60, %p61
    %p63 = scmp.ne.s32.totalorder %s51, %s52
    %p64 = scmp.eq.s32.totalorder %s21, 1
    %p65 = por %p63, %p64
    %p67 = scmp.ne.s32.totalorder %s52, %s66
    %p68 = scmp.eq.s32.totalorder %s21, 0
    %p69 = por %p67, %p68
    %s71 = sadd.s32 %s70, 1
    %p74 = scmp.eq.s32.totalorder %s15, 1
    %p75 = scmp.ne.s32.totalorder %s70, %s72
    %p76 = scmp.eq.s32.totalorder %s15, 0
    %p77 = por %p75, %p76
    %p78 = scmp.ne.s32.totalorder %s70, %s72
    %p79 = scmp.eq.s32.totalorder %s20, 1
    %p80 = por %p78, %p79
    %p81 = scmp.ne.s32.totalorder %s72, %s73
    %p82 = scmp.eq.s32.totalorder %s20, 0
    %p83 = por %p81, %p82
    %p84 = scmp.ne.s32.totalorder %s72, %s73
    %p85 = scmp.eq.s32.totalorder %s21, 1
    %p86 = por %p84, %p85
    %p88 = scmp.ne.s32.totalorder %s73, %s87
    %p89 = scmp.eq.s32.totalorder %s21, 0
    %p90 = por %p88, %p89
    %s91 = ssub.s32 %s15, %s22
    %p92 = scmp.eq.s32.totalorder %s91, 0
    %s94 = sadd.s32 %s93, 1
    %s95 = scalar_select %p92, %s93, %s94
    %p98 = pneg %p92
    %p99 = scmp.eq.s32.totalorder %s15, 1
    %p100 = por %p98, %p99
    %p101 = scmp.ne.s32.totalorder %s93, %s96
    %p102 = scmp.eq.s32.totalorder %s15, 0
    %p103 = por %p101, %p102
    %p104 = scmp.ne.s32.totalorder %s93, %s96
    %p105 = scmp.eq.s32.totalorder %s20, 1
    %p106 = por %p104, %p105
    %p107 = scmp.ne.s32.totalorder %s96, %s97
    %p108 = scmp.eq.s32.totalorder %s20, 0
    %p109 = por %p107, %p108
    %p110 = scmp.ne.s32.totalorder %s96, %s97
    %p111 = scmp.eq.s32.totalorder %s21, 1
    %p112 = por %p110, %p111
    %p114 = scmp.ne.s32.totalorder %s97, %s113
    %p115 = scmp.eq.s32.totalorder %s21, 0
    %p116 = por %p114, %p115
    %p117 = scmp.le.s32.totalorder 1, %s15
    %p118 = scmp.lt.s32.totalorder %s15, 3
    %p119 = pnand %p117, %p118
    %p120 = pneg %p119
    // Predicated region
    $region9: #{patch_embedding.2} parent=5 // pred_check
      _
    $region10: #{patch_embedding.2} parent=5 // pred_check_branch
      %122 = sbr.rel (%p119) target = $region12
    $region11: #{patch_embedding.2} parent=5 // pred_region
      %s123 = ssub.s32 %s15, 1
      // Predicated region
      $region13: #{patch_embedding.2} parent=11 // pred_check
        %p124 = pneg %p62
      $region14: #{patch_embedding.2} parent=11 // pred_check_branch
        %126 = sbr.rel (%p124) target = $region16
      $region15: #{patch_embedding.2} parent=11 // pred_region
        _
      $region16: #{patch_embedding.2} parent=11 // pred_fallthru
        _
      // Predicated region
      $region17: #{patch_embedding.2} parent=11 // pred_check
        %p127 = pneg %p83
      $region18: #{patch_embedding.2} parent=11 // pred_check_branch
        %129 = sbr.rel (%p127) target = $region20
      $region19: #{patch_embedding.2} parent=11 // pred_region
        _
      $region20: #{patch_embedding.2} parent=11 // pred_fallthru
        _
    $region12: #{patch_embedding.2} parent=5 // pred_fallthru
      _
    %p130 = scmp.lt.s32.totalorder %s15, 2
    // Predicated region
    $region21: #{patch_embedding.2} parent=5 // pred_check
      %p131 = pneg %p130
    $region22: #{patch_embedding.2} parent=5 // pred_check_branch
      %133 = sbr.rel (%p131) target = $region24
    $region23: #{patch_embedding.2} parent=5 // pred_region
      // Predicated region
      $region25: #{patch_embedding.2} parent=23 // pred_check
        %p134 = pneg %p35
      $region26: #{patch_embedding.2} parent=23 // pred_check_branch
        %136 = sbr.rel (%p134) target = $region28
      $region27: #{patch_embedding.2} parent=23 // pred_region
        %s137 = smul.u32 2, %s15
        %p138 = scmp.lt.s32.totalorder %s137, 3
        %s139 = scalar_select %p138, %s137, 3
        %s140 = smul.addr %s139, 2
        %s141 = sadd.s32 4294967295, %s140
        %s142 = smul.addr %s141, 4
        %s143 = scalar_lea.vmem %s2, %s142
        %s144 = smul.u32 2, %s15
      $region28: #{patch_embedding.2} parent=23 // pred_fallthru
        _
    $region24: #{patch_embedding.2} parent=5 // pred_fallthru
      _
    %p145 = scmp.le.s32.totalorder 1, %s15
    %p146 = scmp.lt.s32.totalorder %s15, 3
    %p147 = pnand %p145, %p146
    %p148 = pneg %p147
    // Predicated region
    $region29: #{patch_embedding.2} parent=5 // pred_check
      _
    $region30: #{patch_embedding.2} parent=5 // pred_check_branch
      %150 = sbr.rel (%p147) target = $region32
    $region31: #{patch_embedding.2} parent=5 // pred_region
      #allocation7 [shape = 'u8[16384]{0}', space=vmem, size = 0x4000, dematerialized = true, scoped, tag = 'FusionAdapter Buffer %fusion.1 = bf16[4,32,128]{2,1,0:T(8,128)(2,1)} fusion(%param_2.1, %param_3), kind=kLoop, calls=%fused_computation.2.clone, metadata={op_name="jit(patch_embedding)/jit(_pad)/pad" stack_frame_id=9}']
      %s151 = ssub.s32 %s15, 1
      %s152 = smul.u32 2, %s20
      %p153 = scmp.lt.s32.totalorder %s152, 3
      %s154 = scalar_select %p153, %s152, 3
      %s155 = smul.addr %s154, 2
      %s156 = sadd.s32 4294967295, %s155
      %s157 = smul.addr %s156, 4
      %s158 = scalar_lea.vmem %s2, %s157
      %p159 = pneg %p41
      %p160 = pneg %p38
      %p161 = pneg %p62
      %p162 = pneg %p59
      %p163 = pneg %p83
      %p164 = pneg %p80
      %p165 = pneg %p109
      %p166 = pneg %p106
      %s167 = smul.u32 2, %s20
      %p168 = scmp.lt.s32.totalorder %s167, 3
      %s169 = scalar_select %p168, %s167, 3
      %s170 = smul.addr %s169, 4
      %s171 = smul.addr %s170, 8
      %s172 = scalar_lea.vmem %s4, %s171
      %s173 = smul.u32 2, %s20
      %p174 = scmp.lt.s32.totalorder %s173, 3
      %s175 = scalar_select %p174, %s173, 3
      %s176 = smul.addr %s175, 2
      %s177 = sadd.s32 4294967295, %s176
      %s178 = smul.addr %s177, 4
      %s179 = scalar_lea.vmem %s2, %s178
      %s180 = smul.u32 2, %s20
      %s181 = smul.u32 2, %s20
      %p182 = scmp.lt.s32.totalorder %s181, 3
      %s183 = scalar_select %p182, %s181, 3
      %s184 = smul.addr %s183, 4
      %s185 = smul.addr %s184, 8
      %s186 = scalar_lea.vmem %s4, %s185
      %s187 = smul.u32 2, %s20
      %s189 = sand.u32 0, 85
      %s190 = sshrl.u32 %s189, 1
      %s191 = sor.u32 %s189, %s190
      %s192 = sand.u32 51, %s191
      %s193 = sshrl.u32 %s192, 2
      %s194 = sor.u32 %s192, %s193
      %s195 = sand.u32 15, %s194
      %v196 = vld [vmem:[%s179] sm:%s195]
      %v197 = vunpack.c.l.bf16 %v196
      %v198 = vunpack.c.h.bf16 %v196
      %s199 = scalar_lea.vmem %s179, 4
      %s201 = sor.u32 255, 127
      %s202 = sand.u32 %s201, 85
      %s203 = sshrl.u32 %s202, 1
      %s204 = sor.u32 %s202, %s203
      %s205 = sand.u32 51, %s204
      %s206 = sshrl.u32 %s205, 2
      %s207 = sor.u32 %s205, %s206
      %s208 = sand.u32 15, %s207
      %v209 = vld [vmem:[%s199] sm:%s208]
      %v210 = vunpack.c.l.bf16 %v209
      %v211 = vunpack.c.h.bf16 %v209
      %v212 = vlaneseq
      %v213 = vand.u32 %v212, 127
      %vm215 = vcmp.lt.s32.totalorder %v213, 48
      %v216 = vsel %vm215, %v210, %v10
      %vm217 = vcmask 1044480
      %v218 = vsel %vm217, %v216, %v10
      %v219 = vrot.slane %v218, 5
      %v220 = vpack.c.bf16 0.0, %v219
      %222 = vst [vmem:[#allocation7] sm:$0xf] %v220
      %s223 = scalar_lea.vmem %s179, 8
      %s225 = sor.u32 255, 127
      %s226 = sand.u32 %s225, 85
      %s227 = sshrl.u32 %s226, 1
      %s228 = sor.u32 %s226, %s227
      %s229 = sand.u32 51, %s228
      %s230 = sshrl.u32 %s229, 2
      %s231 = sor.u32 %s229, %s230
      %s232 = sand.u32 15, %s231
      %v233 = vld [vmem:[%s223] sm:%s232]
      %v234 = vunpack.c.l.bf16 %v233
      %v235 = vunpack.c.h.bf16 %v233
      %v236 = vlaneseq
      %v237 = vand.u32 %v236, 127
      %vm239 = vcmp.lt.s32.totalorder %v237, 48
      %v240 = vsel %vm239, %v234, %v10
      %vm241 = vcmask 1044480
      %v242 = vsel %vm241, %v240, %v216
      %v243 = vrot.slane %v242, 5
      %s244 = scalar_lea.vmem [#allocation7], 4
      %v245 = vpack.c.bf16 0.0, %v243
      %247 = vst [vmem:[%s244] sm:$0xf] %v245
      %vm248 = vcmask 1044480
      %v249 = vsel %vm248, %v10, %v240
      %v250 = vrot.slane %v249, 5
      %s251 = scalar_lea.vmem [#allocation7], 8
      %v252 = vpack.c.bf16 0.0, %v250
      %254 = vst [vmem:[%s251] sm:$0xf] %v252
      %s255 = scalar_lea.vmem [#allocation7], 12
      %v256 = vpack.c.bf16 0.0, %v10
      %258 = vst [vmem:[%s255] sm:$0xf] %v256
      %s259 = scalar_lea.vmem %s179, 8
      %s261 = sand.u32 0, 85
      %s262 = sshrl.u32 %s261, 1
      %s263 = sor.u32 %s261, %s262
      %s264 = sand.u32 51, %s263
      %s265 = sshrl.u32 %s264, 2
      %s266 = sor.u32 %s264, %s265
      %s267 = sand.u32 15, %s266
      %v268 = vld [vmem:[%s259] sm:%s267]
      %v269 = vunpack.c.l.bf16 %v268
      %v270 = vunpack.c.h.bf16 %v268
      %s271 = scalar_lea.vmem %s179, 12
      %s273 = sor.u32 255, 127
      %s274 = sand.u32 %s273, 85
      %s275 = sshrl.u32 %s274, 1
      %s276 = sor.u32 %s274, %s275
      %s277 = sand.u32 51, %s276
      %s278 = sshrl.u32 %s277, 2
      %s279 = sor.u32 %s277, %s278
      %s280 = sand.u32 15, %s279
      %v281 = vld [vmem:[%s271] sm:%s280]
      %v282 = vunpack.c.l.bf16 %v281
      %v283 = vunpack.c.h.bf16 %v281
      %v284 = vlaneseq
      %v285 = vand.u32 %v284, 127
      %vm287 = vcmp.lt.s32.totalorder %v285, 48
      %v288 = vsel %vm287, %v282, %v10
      %vm289 = vcmask 1044480
      %v290 = vsel %vm289, %v288, %v10
      %v291 = vrot.slane %v290, 5
      %s292 = scalar_lea.vmem [#allocation7], 16
      %v293 = vpack.c.bf16 0.0, %v291
      %295 = vst [vmem:[%s292] sm:$0xf] %v293
      %s296 = scalar_lea.vmem %s179, 16
      %s298 = sor.u32 255, 127
      %s299 = sand.u32 %s298, 85
      %s300 = sshrl.u32 %s299, 1
      %s301 = sor.u32 %s299, %s300
      %s302 = sand.u32 51, %s301
      %s303 = sshrl.u32 %s302, 2
      %s304 = sor.u32 %s302, %s303
      %s305 = sand.u32 15, %s304
      %v306 = vld [vmem:[%s296] sm:%s305]
      %v307 = vunpack.c.l.bf16 %v306
      %v308 = vunpack.c.h.bf16 %v306
      %v309 = vlaneseq
      %v310 = vand.u32 %v309, 127
      %vm312 = vcmp.lt.s32.totalorder %v310, 48
      %v313 = vsel %vm312, %v307, %v10
      %vm314 = vcmask 1044480
      %v315 = vsel %vm314, %v313, %v288
      %v316 = vrot.slane %v315, 5
      %s317 = scalar_lea.vmem [#allocation7], 20
      %v318 = vpack.c.bf16 0.0, %v316
      %320 = vst [vmem:[%s317] sm:$0xf] %v318
      %vm321 = vcmask 1044480
      %v322 = vsel %vm321, %v10, %v313
      %v323 = vrot.slane %v322, 5
      %s324 = scalar_lea.vmem [#allocation7], 24
      %v325 = vpack.c.bf16 0.0, %v323
      %327 = vst [vmem:[%s324] sm:$0xf] %v325
      %s328 = scalar_lea.vmem [#allocation7], 28
      %v329 = vpack.c.bf16 0.0, %v10
      %331 = vst [vmem:[%s328] sm:$0xf] %v329
      %v333 = vld [vmem:[#allocation7] sm:$0xf]
      %v334 = vld [vmem:[#allocation7 + $0x4] sm:$0xf]
      %v335 = vld [vmem:[#allocation7 + $0x8] sm:$0xf]
      %v336 = vld [vmem:[#allocation7 + $0xc] sm:$0xf]
      %v337 = vld [vmem:[#allocation7 + $0x10] sm:$0xf]
      %v338 = vld [vmem:[#allocation7 + $0x14] sm:$0xf]
      %v339 = vld [vmem:[#allocation7 + $0x18] sm:$0xf]
      %v340 = vld [vmem:[#allocation7 + $0x1c] sm:$0xf]
      %v341 = vld [vmem:[%s0] sm:$0xf]
      %v342 = vld [vmem:[%s0 + $0x4] sm:$0xf]
      %v343 = vld [vmem:[%s0 + $0x8] sm:$0xf]
      %v344 = vld [vmem:[%s0 + $0xc] sm:$0xf]
      %v345 = vld [vmem:[%s0 + $0x10] sm:$0xf]
      %v346 = vld [vmem:[%s0 + $0x14] sm:$0xf]
      %v347 = vld [vmem:[%s0 + $0x18] sm:$0xf]
      %v348 = vld [vmem:[%s0 + $0x1c] sm:$0xf]
      %v349 = vld [vmem:[%s0 + $0x20] sm:$0xf]
      %v350 = vld [vmem:[%s0 + $0x24] sm:$0xf]
      %v351 = vld [vmem:[%s0 + $0x28] sm:$0xf]
      %v352 = vld [vmem:[%s0 + $0x2c] sm:$0xf]
      %v353 = vld [vmem:[%s0 + $0x30] sm:$0xf]
      %v354 = vld [vmem:[%s0 + $0x34] sm:$0xf]
      %v355 = vld [vmem:[%s0 + $0x38] sm:$0xf]
      %v356 = vld [vmem:[%s0 + $0x3c] sm:$0xf]
      %v365 = vunpack.c.l.b16 %v333
      %v366 = vunpack.c.l.b16 %v334
      %v367 = vunpack.c.l.b16 %v335
      %v368 = vunpack.c.l.b16 %v336
      %v369 = vunpack.c.l.b16 %v337
      %v370 = vunpack.c.l.b16 %v338
      %v371 = vunpack.c.l.b16 %v339
      %v372 = vunpack.c.l.b16 %v340
      %v373 = vpack.c.b16 %v366, %v365
      %v374 = vpack.c.b16 %v368, %v367
      %v375 = vpack.c.b16 %v370, %v369
      %v376 = vpack.c.b16 %v372, %v371
      %v397 = vunpack.c.l.b16 %v341
      %v398 = vunpack.c.l.b16 %v342
      %v399 = vunpack.c.l.b16 %v343
      %v400 = vunpack.c.l.b16 %v344
      %v401 = vunpack.c.l.b16 %v345
      %v402 = vunpack.c.l.b16 %v346
      %v403 = vunpack.c.l.b16 %v347
      %v404 = vunpack.c.l.b16 %v348
      %v405 = vunpack.c.l.b16 %v349
      %v406 = vunpack.c.l.b16 %v350
      %v407 = vunpack.c.l.b16 %v351
      %v408 = vunpack.c.l.b16 %v352
      %v409 = vunpack.c.l.b16 %v353
      %v410 = vunpack.c.l.b16 %v354
      %v411 = vunpack.c.l.b16 %v355
      %v412 = vunpack.c.l.b16 %v356
      %v413 = vpack.c.b16 %v398, %v397
      %v414 = vpack.c.b16 %v400, %v399
      %v415 = vpack.c.b16 %v402, %v401
      %v416 = vpack.c.b16 %v404, %v403
      %v417 = vpack.c.b16 %v406, %v405
      %v418 = vpack.c.b16 %v408, %v407
      %v419 = vpack.c.b16 %v410, %v409
      %v420 = vpack.c.b16 %v412, %v411
      %429 = vmatprep.subr.bf16.mxu0 0
      %430 = vmatpush1.bf16.msra.mxu0 %v413
      %431 = vmatprep.subr.bf16.mxu0 0
      %432 = vmatpush1.bf16.msra.mxu0 %v414
      %433 = vmatprep.subr.bf16.mxu0 0
      %434 = vmatpush1.bf16.msra.mxu0 %v415
      %435 = vmatprep.subr.bf16.mxu0 0
      %436 = vmatpush1.bf16.msra.mxu0 %v416
      %437 = vmatprep.subr.bf16.mxu0 0
      %438 = vmatpush1.bf16.msra.mxu0 %v417
      %439 = vmatprep.subr.bf16.mxu0 0
      %440 = vmatpush1.bf16.msra.mxu0 %v418
      %441 = vmatprep.subr.bf16.mxu0 0
      %442 = vmatpush1.bf16.msra.mxu0 %v419
      %443 = vmatprep.subr.bf16.mxu0 0
      %444 = vmatpush1.bf16.msra.mxu0 %v420
      %445 = vmatprep.subr.bf16.mxu0 0
      %446 = vmatpush1.bf16.msra.mxu0 0
      %447 = vmatprep.subr.bf16.mxu0 0
      %448 = vmatpush1.bf16.msra.mxu0 0
      %449 = vmatprep.subr.bf16.mxu0 0
      %450 = vmatpush1.bf16.msra.mxu0 0
      %451 = vmatprep.subr.bf16.mxu0 0
      %452 = vmatpush1.bf16.msra.mxu0 0
      %453 = vmatprep.subr.bf16.mxu0 0
      %454 = vmatpush1.bf16.msra.mxu0 0
      %455 = vmatprep.subr.bf16.mxu0 0
      %456 = vmatpush1.bf16.msra.mxu0 0
      %457 = vmatprep.subr.bf16.mxu0 0
      %458 = vmatpush1.bf16.msra.mxu0 0
      %459 = vmatprep.subr.bf16.mxu0 0
      %460 = vmatpush1.bf16.msra.mxu0 0
      %461 = vmatprep.mubr.bf16.mxu0 0
      %462 = vmatmul.mubr.bf16.gmra.mrb[0].mxu0 %v373
      %v463 = vpop.f32.mrb[0].mxu0
      %v464 = vadd.f32 0.0, %v463
      %v465 = vpop.f32.mrb[0].mxu0
      %v466 = vpop.f32.mrb[0].mxu0
      %v467 = vadd.f32 0.0, %v466
      %v468 = vpop.f32.mrb[0].mxu0
      %469 = vmatprep.mubr.bf16.mxu0 0
      %470 = vmatmul.mubr.bf16.gmra.mrb[0].mxu0 %v374
      %v471 = vpop.f32.mrb[0].mxu0
      %v472 = vadd.f32 0.0, %v471
      %v473 = vpop.f32.mrb[0].mxu0
      %v474 = vpop.f32.mrb[0].mxu0
      %v475 = vadd.f32 0.0, %v474
      %v476 = vpop.f32.mrb[0].mxu0
      %477 = vmatprep.mubr.bf16.mxu0 0
      %478 = vmatmul.mubr.bf16.gmra.mrb[0].mxu0 %v375
      %v479 = vpop.f32.mrb[0].mxu0
      %v480 = vadd.f32 0.0, %v479
      %v481 = vpop.f32.mrb[0].mxu0
      %v482 = vpop.f32.mrb[0].mxu0
      %v483 = vadd.f32 0.0, %v482
      %v484 = vpop.f32.mrb[0].mxu0
      %485 = vmatprep.mubr.bf16.mxu0 0
      %486 = vmatmul.mubr.bf16.gmra.mrb[0].mxu0 %v376
      %v487 = vpop.f32.mrb[0].mxu0
      %v488 = vadd.f32 0.0, %v487
      %v489 = vpop.f32.mrb[0].mxu0
      %v490 = vpop.f32.mrb[0].mxu0
      %v491 = vadd.f32 0.0, %v490
      %v492 = vpop.f32.mrb[0].mxu0
      %493 = vdwg.mxu0
      %v494 = vld [vmem:[%s1] sm:$0xff]
      %v495 = vld [vmem:[%s1 + $0x8] sm:$0xff]
      %v496 = vld [vmem:[%s1 + $0x10] sm:$0xff]
      %v497 = vld [vmem:[%s1 + $0x18] sm:$0xff]
      %v498 = vadd.f32 %v464, %v494
      %v499 = vadd.f32 %v467, %v495
      %v500 = vadd.f32 %v472, %v496
      %v501 = vadd.f32 %v475, %v497
      %v502 = vadd.f32 %v480, %v494
      %v503 = vadd.f32 %v483, %v495
      %v504 = vadd.f32 %v488, %v496
      %v505 = vadd.f32 %v491, %v497
      %506 = vst [vmem:[%s186] sm:$0xff] %v498
      %507 = vst [vmem:[%s186 + $0x8] sm:$0xff] %v499
      %508 = vst [vmem:[%s186 + $0x10] sm:$0xff] %v500
      %509 = vst [vmem:[%s186 + $0x18] sm:$0xff] %v501
      %510 = vst [vmem:[%s186 + $0x20] sm:$0xff] %v502
      %511 = vst [vmem:[%s186 + $0x28] sm:$0xff] %v503
      %512 = vst [vmem:[%s186 + $0x30] sm:$0xff] %v504
      %513 = vst [vmem:[%s186 + $0x38] sm:$0xff] %v505
      %s514 = smul.u32 2, %s20
      %p515 = scmp.lt.s32.totalorder %s514, 3
      %s516 = scalar_select %p515, %s514, 3
      %s517 = smul.addr %s516, 4
      %s518 = smul.addr %s517, 8
      %s519 = scalar_lea.vmem %s4, %s518
      // Predicated region
      $region33: #{patch_embedding.2} parent=31 // pred_check
        %p520 = pneg %p106
      $region34: #{patch_embedding.2} parent=31 // pred_check_branch
        %522 = sbr.rel (%p520) target = $region36
      $region35: #{patch_embedding.2} parent=31 // pred_region
        %s523 = smul.u32 2, %s20
      $region36: #{patch_embedding.2} parent=31 // pred_fallthru
        _
    $region32: #{patch_embedding.2} parent=5 // pred_fallthru
      _
    %p524 = scmp.le.s32.totalorder 2, %s15
    // Predicated region
    $region37: #{patch_embedding.2} parent=5 // pred_check
      %p525 = pneg %p524
    $region38: #{patch_embedding.2} parent=5 // pred_check_branch
      %527 = sbr.rel (%p525) target = $region40
    $region39: #{patch_embedding.2} parent=5 // pred_region
      %s528 = ssub.s32 %s15, 2
      // Predicated region
      $region41: #{patch_embedding.2} parent=39 // pred_check
        %p529 = pneg %p112
      $region42: #{patch_embedding.2} parent=39 // pred_check_branch
        %531 = sbr.rel (%p529) target = $region44
      $region43: #{patch_embedding.2} parent=39 // pred_region
        %s532 = smul.u32 2, %s21
        %p533 = scmp.lt.s32.totalorder %s532, 3
        %s534 = scalar_select %p533, %s532, 3
        %s535 = smul.addr %s534, 4
        %s536 = smul.addr %s535, 8
        %s537 = scalar_lea.vmem %s4, %s536
      $region44: #{patch_embedding.2} parent=39 // pred_fallthru
        _
    $region40: #{patch_embedding.2} parent=5 // pred_fallthru
      _
  $region6: #{patch_embedding.2} parent=0 // loop_footer
    %s19 = sadd.s32 1, %s15
  $region7: #{patch_embedding.2} parent=0 // loop_footer_branch
    %14 = sbr.rel target = $region3
  $region8: #{patch_embedding.2} parent=0 // loop_exit
    _

</llo_original>
